<compile_context>
chip_gen: v5e
topology: v5e:2x2
jax: 0.10.0
libtpu: 0.0.40
codegen_flags: <defaults>
</compile_context>

<pallas_src>
import jax
import jax.numpy as jnp
from jax.experimental import pallas as pl
from jax.experimental.pallas import tpu as pltpu


_LRELU_SLOPE = 0.2  # matches nn.LeakyReLU(0.2)


def _round_up(x, m):
    return ((x + m - 1) // m) * m


def _leaky_relu(x, slope=_LRELU_SLOPE):
    return jnp.where(x > 0, x, x * slope)


def _make_discriminator_kernel(bf16_act):
    """bf16_act: run the LeakyReLU element-wise math in bf16 (v6e/v7x VPU)."""
    act_dtype = jnp.bfloat16 if bf16_act else jnp.float32

    def kernel(data_ref, types_ref,
               w1_ref, b1_ref, w2_ref, b2_ref, w3_ref, b3_ref,
               w4_ref, b4_ref,
               out_ref, *emb_refs):
        # ---- fc1: single fused matmul over concat(data, types) ------------
        xd = data_ref[...].astype(jnp.bfloat16)
        xt = types_ref[...].astype(jnp.bfloat16)
        x = jnp.concatenate([xd, xt], axis=-1)          # lane concat (XLU)
        h1 = jnp.dot(x, w1_ref[...], preferred_element_type=jnp.float32)
        h1 = h1 + b1_ref[...]                            # bias in f32
        h1 = _leaky_relu(h1.astype(act_dtype)).astype(jnp.bfloat16)

        # ---- fc2 ------------------------------------------------------------
        h2 = jnp.dot(h1, w2_ref[...], preferred_element_type=jnp.float32)
        h2 = h2 + b2_ref[...]
        h2 = _leaky_relu(h2.astype(act_dtype)).astype(jnp.bfloat16)

        # ---- fc3 (embeddings) ----------------------------------------------
        emb = jnp.dot(h2, w3_ref[...], preferred_element_type=jnp.float32)
        emb = emb + b3_ref[...]
        emb = _leaky_relu(emb.astype(act_dtype))

        if emb_refs:  # static (trace-time) branch: emb output only if requested
            emb_refs[0][...] = emb.astype(emb_refs[0].dtype)

        # ---- fc4 (N == 1): VPU multiply + XLU lane reduction ---------------
        prod = emb.astype(jnp.float32) * w4_ref[...]      # (tm, emb_dim) f32
        logit = jnp.sum(prod, axis=-1, keepdims=True) + b4_ref[0, 0]

        # Numerically stable sigmoid: exp argument is always <= 0, so no inf;
        # exp + approximate reciprocal both land on the (idle) EUP.
        e = jnp.exp(-jnp.abs(logit))
        sig = jnp.where(logit >= 0, 1.0, e) * pl.reciprocal(1.0 + e, approx=True)
        out_ref[...] = jnp.clip(sig, 0.0, 1.0)            # BCE-safe range

    return kernel


def discriminator_forward(data, transaction_types, params,
                          return_embedding=False, *,
                          embedding_dtype=jnp.float32, tm_max=None):
    """JAX wrapper mirroring Discriminator.forward.

    data / transaction_types may be f32 or bf16 (bf16 halves input DMA).
    embedding_dtype: dtype of the returned embeddings (bf16 halves writeback).
    tm_max: cap on the batch tile (multiple of 16); chosen per device if None.
    """
    B, input_dim = data.shape
    type_dim = transaction_types.shape[1]
    K = input_dim + type_dim
    emb_dim = params["w3"].shape[1]

    kind = jax.devices()[0].device_kind.lower()
    bf16_act = not any(t in kind for t in ("v2", "v3", "v4", "v5"))
    if tm_max is None:
        tm_max = 1024 if "v5" in kind else 2048

    # Weights: bf16 for the MXU (resident in VMEM, DMA'd once); biases and
    # the N==1 final layer stay f32.  Weight tensors are tiny (~350 KB).
    w1 = params["w1"].astype(jnp.bfloat16)                 # (K, 512)
    w2 = params["w2"].astype(jnp.bfloat16)                 # (512, 256)
    w3 = params["w3"].astype(jnp.bfloat16)                 # (256, emb_dim)
    w4 = params["w4"].reshape(1, emb_dim).astype(jnp.float32)
    b1 = params["b1"].reshape(1, -1).astype(jnp.float32)
    b2 = params["b2"].reshape(1, -1).astype(jnp.float32)
    b3 = params["b3"].reshape(1, -1).astype(jnp.float32)
    b4 = params["b4"].reshape(1, 1).astype(jnp.float32)    # scalar -> SMEM

    # Batch tile: ~4 grid steps (>=2 per TensorCore on v7x, pipeline overlap
    # on 1-TC chips), >=256 rows to amortize the ~0.35us per-step overhead,
    # 16-row granule (bf16 sublane packing), capped for the VMEM budget.
    tm = _round_up(pl.cdiv(B, 4), 16)
    tm = max(tm, 256)
    tm = min(tm, tm_max, _round_up(B, 16))
    tm = max(16, (tm // 16) * 16)
    Bp = _round_up(B, tm)

    if Bp != B:
        pad = ((0, Bp - B), (0, 0))
        data_p = jnp.pad(data, pad)
        types_p = jnp.pad(transaction_types, pad)
    else:
        data_p, types_p = data, transaction_types

    grid = (Bp // tm,)

    def _rows(d):
        return pl.BlockSpec((tm, d), lambda i: (i, 0))

    def _resident(shape):
        # Constant index_map: fetched once, stays in VMEM across all steps.
        return pl.BlockSpec(shape, lambda i: (0, 0))

    in_specs = [
        _rows(input_dim),                                   # data
        _rows(type_dim),                                    # transaction_types
        _resident((K, 512)),                                # w1 (fused)
        _resident((1, 512)),                                # b1
        _resident((512, 256)),                              # w2
        _resident((1, 256)),                                # b2
        _resident((256, emb_dim)),                          # w3
        _resident((1, emb_dim)),                            # b3
        _resident((1, emb_dim)),                            # w4 as a row
        pl.BlockSpec(memory_space=pltpu.MemorySpace.SMEM),  # b4 scalar
    ]

    out_specs = [pl.BlockSpec((tm, 1), lambda i: (i, 0))]
    out_shape = [jax.ShapeDtypeStruct((Bp, 1), jnp.float32)]
    if return_embedding:
        out_specs.append(pl.BlockSpec((tm, emb_dim), lambda i: (i, 0)))
        out_shape.append(jax.ShapeDtypeStruct((Bp, emb_dim), embedding_dtype))

    kernel = _make_discriminator_kernel(bf16_act)

    result = pl.pallas_call(
        kernel,
        grid=grid,
        in_specs=in_specs,
        out_specs=tuple(out_specs) if return_embedding else out_specs[0],
        out_shape=tuple(out_shape) if return_embedding else out_shape[0],
        compiler_params=pltpu.CompilerParams(
            dimension_semantics=("parallel",),
            vmem_limit_bytes=32 * 1024 * 1024),
    )(data_p, types_p, w1, b1, w2, b2, w3, b3, w4, b4)

    if return_embedding:
        out, emb = result
        return out[:B], emb[:B]
    return result[:B]


def init_params(key, input_dim, transaction_type_dim, embedding_dim=128):
    """nn.Linear default init: U(-1/sqrt(fan_in), 1/sqrt(fan_in)); x @ W layout."""
    dims = [(input_dim + transaction_type_dim, 512),
            (512, 256),
            (256, embedding_dim),
            (embedding_dim, 1)]
    params = {}
    for i, (fan_in, fan_out) in enumerate(dims, start=1):
        key, kw, kb = jax.random.split(key, 3)
        bound = 1.0 / (fan_in ** 0.5)
        params[f"w{i}"] = jax.random.uniform(
            kw, (fan_in, fan_out), jnp.float32, -bound, bound)
        params[f"b{i}"] = jax.random.uniform(
            kb, (1, fan_out), jnp.float32, -bound, bound)
    return params


def discriminator_reference(data, transaction_types, params):
    """Pure-JAX f32 reference matching the PyTorch module exactly."""
    x = jnp.concatenate([data.astype(jnp.float32),
                         transaction_types.astype(jnp.float32)], axis=1)
    h = _leaky_relu(x @ params["w1"] + params["b1"])
    h = _leaky_relu(h @ params["w2"] + params["b2"])
    emb = _leaky_relu(h @ params["w3"] + params["b3"])
    out = jax.nn.sigmoid(emb @ params["w4"] + params["b4"])
    return out, emb


if __name__ == "__main__":
    key = jax.random.PRNGKey(0)

    batch = 8
    input_dim = 16
    transaction_type_dim = 8
    embedding_dim = 128

    k_params, k_data, k_types = jax.random.split(key, 3)
    params = init_params(k_params, input_dim, transaction_type_dim, embedding_dim)

    # bf16 at the API boundary (halves input DMA; the kernel also accepts f32).
    data = jax.random.normal(k_data, (batch, input_dim), jnp.bfloat16)
    type_ids = jax.random.randint(k_types, (batch,), 0, transaction_type_dim)
    transaction_types = jax.nn.one_hot(type_ids, transaction_type_dim,
                                       dtype=jnp.bfloat16)

    out, emb = discriminator_forward(data, transaction_types, params,
                                     return_embedding=True)
    out_only = discriminator_forward(data, transaction_types, params,
                                     return_embedding=False)
    jax.block_until_ready((out, emb, out_only))

    assert out.shape == (batch, 1)
    assert out_only.shape == (batch, 1)
    assert emb.shape == (batch, embedding_dim)

    ref_out, ref_emb = discriminator_reference(data, transaction_types, params)
    assert bool(jnp.all(jnp.isfinite(out))) and bool(jnp.all(jnp.isfinite(emb)))
    assert bool(jnp.all((out >= 0.0) & (out <= 1.0)))
    assert bool(jnp.allclose(out, out_only, atol=1e-6))
    # bf16 weights/activations -> allow ~1e-2-scale deviation from f32 reference.
    assert bool(jnp.allclose(out, ref_out, atol=3e-2))
    assert bool(jnp.allclose(emb, ref_emb.astype(emb.dtype), atol=3e-2))

    print("KERNEL_OK")
</pallas_src>

<mosaic_0001>
module attributes {stable_mosaic.version = 11 : i64} {
  func.func @kernel(%arg0: i32, %arg1: memref<16x16xbf16, #tpu.memory_space<vmem>>, %arg2: memref<16x8xbf16, #tpu.memory_space<vmem>>, %arg3: memref<24x512xbf16, #tpu.memory_space<vmem>>, %arg4: memref<1x512xf32, #tpu.memory_space<vmem>>, %arg5: memref<512x256xbf16, #tpu.memory_space<vmem>>, %arg6: memref<1x256xf32, #tpu.memory_space<vmem>>, %arg7: memref<256x128xbf16, #tpu.memory_space<vmem>>, %arg8: memref<1x128xf32, #tpu.memory_space<vmem>>, %arg9: memref<1x128xf32, #tpu.memory_space<vmem>>, %arg10: memref<1x1xf32, #tpu.memory_space<smem>>, %arg11: memref<16x1xf32, #tpu.memory_space<vmem>>, %arg12: memref<16x128xf32, #tpu.memory_space<vmem>>) attributes {dimension_semantics = [#tpu.dimension_semantics<parallel>], iteration_bounds = array<i64: 1>, scalar_prefetch = 0 : i64, scratch_operands = 0 : i64, tpu.core_type = #tpu.core_type<tc>, window_params = [{transform_indices = @transform_0, window_bounds = array<i64: 16, 16>}, {transform_indices = @transform_1, window_bounds = array<i64: 16, 8>}, {pipeline_mode = #tpu.pipeline_mode<synchronous>, transform_indices = @transform_2, window_bounds = array<i64: 24, 512>}, {pipeline_mode = #tpu.pipeline_mode<synchronous>, transform_indices = @transform_3, window_bounds = array<i64: 1, 512>}, {pipeline_mode = #tpu.pipeline_mode<synchronous>, transform_indices = @transform_4, window_bounds = array<i64: 512, 256>}, {pipeline_mode = #tpu.pipeline_mode<synchronous>, transform_indices = @transform_5, window_bounds = array<i64: 1, 256>}, {pipeline_mode = #tpu.pipeline_mode<synchronous>, transform_indices = @transform_6, window_bounds = array<i64: 256, 128>}, {pipeline_mode = #tpu.pipeline_mode<synchronous>, transform_indices = @transform_7, window_bounds = array<i64: 1, 128>}, {pipeline_mode = #tpu.pipeline_mode<synchronous>, transform_indices = @transform_8, window_bounds = array<i64: 1, 128>}, {transform_indices = @transform_9, window_bounds = array<i64: 1, 1>}, {transform_indices = @transform_10, window_bounds = array<i64: 16, 1>}, {transform_indices = @transform_11, window_bounds = array<i64: 16, 128>}]} {
    %c0 = arith.constant 0 : index
    %c0_0 = arith.constant 0 : index
    %0 = vector.load %arg1[%c0, %c0_0] : memref<16x16xbf16, #tpu.memory_space<vmem>>, vector<16x16xbf16>
    %c0_1 = arith.constant 0 : index
    %c0_2 = arith.constant 0 : index
    %1 = vector.load %arg2[%c0_1, %c0_2] : memref<16x8xbf16, #tpu.memory_space<vmem>>, vector<16x8xbf16>
    %2 = tpu.concatenate %0, %1 in 1 : vector<16x16xbf16>, vector<16x8xbf16> -> vector<16x24xbf16>
    %c0_3 = arith.constant 0 : index
    %c0_4 = arith.constant 0 : index
    %3 = vector.load %arg3[%c0_3, %c0_4] : memref<24x512xbf16, #tpu.memory_space<vmem>>, vector<24x512xbf16>
    %cst = arith.constant dense<0.000000e+00> : vector<16x512xf32>
    %4 = tpu.matmul %2, %3, %cst {dimension_numbers = #tpu.dot_dimension_numbers<[1], [0], [0], [1], [0, 0, 1, 1], [], []>} : vector<16x24xbf16>, vector<24x512xbf16>, vector<16x512xf32> -> vector<16x512xf32>
    %c0_5 = arith.constant 0 : index
    %c0_6 = arith.constant 0 : index
    %5 = vector.load %arg4[%c0_5, %c0_6] : memref<1x512xf32, #tpu.memory_space<vmem>>, vector<1x512xf32>
    %6 = vector.broadcast %5 : vector<1x512xf32> to vector<16x512xf32>
    %7 = arith.addf %4, %6 : vector<16x512xf32>
    %8 = arith.truncf %7 : vector<16x512xf32> to vector<16x512xbf16>
    %cst_7 = arith.constant 0.000000e+00 : bf16
    %9 = vector.broadcast %cst_7 : bf16 to vector<16x512xbf16>
    %10 = arith.cmpf ogt, %8, %9 : vector<16x512xbf16>
    %cst_8 = arith.constant 2.001950e-01 : bf16
    %11 = vector.broadcast %cst_8 : bf16 to vector<16x512xbf16>
    %12 = arith.mulf %8, %11 : vector<16x512xbf16>
    %13 = arith.select %10, %8, %12 : vector<16x512xi1>, vector<16x512xbf16>
    %c0_9 = arith.constant 0 : index
    %c0_10 = arith.constant 0 : index
    %14 = vector.load %arg5[%c0_9, %c0_10] : memref<512x256xbf16, #tpu.memory_space<vmem>>, vector<512x256xbf16>
    %cst_11 = arith.constant dense<0.000000e+00> : vector<16x256xf32>
    %15 = tpu.matmul %13, %14, %cst_11 {dimension_numbers = #tpu.dot_dimension_numbers<[1], [0], [0], [1], [0, 0, 1, 1], [], []>} : vector<16x512xbf16>, vector<512x256xbf16>, vector<16x256xf32> -> vector<16x256xf32>
    %c0_12 = arith.constant 0 : index
    %c0_13 = arith.constant 0 : index
    %16 = vector.load %arg6[%c0_12, %c0_13] : memref<1x256xf32, #tpu.memory_space<vmem>>, vector<1x256xf32>
    %17 = vector.broadcast %16 : vector<1x256xf32> to vector<16x256xf32>
    %18 = arith.addf %15, %17 : vector<16x256xf32>
    %19 = arith.truncf %18 : vector<16x256xf32> to vector<16x256xbf16>
    %cst_14 = arith.constant 0.000000e+00 : bf16
    %20 = vector.broadcast %cst_14 : bf16 to vector<16x256xbf16>
    %21 = arith.cmpf ogt, %19, %20 : vector<16x256xbf16>
    %cst_15 = arith.constant 2.001950e-01 : bf16
    %22 = vector.broadcast %cst_15 : bf16 to vector<16x256xbf16>
    %23 = arith.mulf %19, %22 : vector<16x256xbf16>
    %24 = arith.select %21, %19, %23 : vector<16x256xi1>, vector<16x256xbf16>
    %c0_16 = arith.constant 0 : index
    %c0_17 = arith.constant 0 : index
    %25 = vector.load %arg7[%c0_16, %c0_17] : memref<256x128xbf16, #tpu.memory_space<vmem>>, vector<256x128xbf16>
    %cst_18 = arith.constant dense<0.000000e+00> : vector<16x128xf32>
    %26 = tpu.matmul %24, %25, %cst_18 {dimension_numbers = #tpu.dot_dimension_numbers<[1], [0], [0], [1], [0, 0, 1, 1], [], []>} : vector<16x256xbf16>, vector<256x128xbf16>, vector<16x128xf32> -> vector<16x128xf32>
    %c0_19 = arith.constant 0 : index
    %c0_20 = arith.constant 0 : index
    %27 = vector.load %arg8[%c0_19, %c0_20] : memref<1x128xf32, #tpu.memory_space<vmem>>, vector<1x128xf32>
    %28 = vector.broadcast %27 : vector<1x128xf32> to vector<16x128xf32>
    %29 = arith.addf %26, %28 : vector<16x128xf32>
    %30 = arith.truncf %29 : vector<16x128xf32> to vector<16x128xbf16>
    %cst_21 = arith.constant 0.000000e+00 : bf16
    %31 = vector.broadcast %cst_21 : bf16 to vector<16x128xbf16>
    %32 = arith.cmpf ogt, %30, %31 : vector<16x128xbf16>
    %cst_22 = arith.constant 2.001950e-01 : bf16
    %33 = vector.broadcast %cst_22 : bf16 to vector<16x128xbf16>
    %34 = arith.mulf %30, %33 : vector<16x128xbf16>
    %35 = arith.select %32, %30, %34 : vector<16x128xi1>, vector<16x128xbf16>
    %36 = arith.extf %35 : vector<16x128xbf16> to vector<16x128xf32>
    %c0_23 = arith.constant 0 : index
    %c0_24 = arith.constant 0 : index
    %37 = vector.load %arg12[%c0_23, %c0_24] : memref<16x128xf32, #tpu.memory_space<vmem>>, vector<16x128xf32>
    tpu.vector_store %arg12[%c0_23, %c0_24], %36 {strides = array<i32>} : memref<16x128xf32, #tpu.memory_space<vmem>>, vector<16x128xf32>,
    %38 = arith.extf %35 : vector<16x128xbf16> to vector<16x128xf32>
    %c0_25 = arith.constant 0 : index
    %c0_26 = arith.constant 0 : index
    %39 = vector.load %arg9[%c0_25, %c0_26] : memref<1x128xf32, #tpu.memory_space<vmem>>, vector<1x128xf32>
    %40 = vector.broadcast %39 : vector<1x128xf32> to vector<16x128xf32>
    %41 = arith.mulf %38, %40 : vector<16x128xf32>
    %cst_27 = arith.constant dense<0.000000e+00> : vector<16xf32>
    %42 = vector.multi_reduction <add>, %41, %cst_27 [1] : vector<16x128xf32> to vector<16xf32>
    %43 = vector.shape_cast %42 : vector<16xf32> to vector<16x1xf32>
    %c0_28 = arith.constant 0 : index
    %c0_29 = arith.constant 0 : index
    %44 = memref.load %arg10[%c0_28, %c0_29] : memref<1x1xf32, #tpu.memory_space<smem>>
    %45 = vector.broadcast %44 : f32 to vector<16x1xf32>
    %46 = arith.addf %43, %45 : vector<16x1xf32>
    %47 = math.absf %46 : vector<16x1xf32>
    %cst_30 = arith.constant 0.000000e+00 : f32
    %48 = vector.broadcast %cst_30 : f32 to vector<16x1xf32>
    %49 = arith.subf %48, %47 : vector<16x1xf32>
    %50 = math.exp %49 : vector<16x1xf32>
    %cst_31 = arith.constant 0.000000e+00 : f32
    %51 = vector.broadcast %cst_31 : f32 to vector<16x1xf32>
    %52 = arith.cmpf oge, %46, %51 : vector<16x1xf32>
    %cst_32 = arith.constant 1.000000e+00 : f32
    %53 = vector.broadcast %cst_32 : f32 to vector<16x1xf32>
    %54 = arith.select %52, %53, %50 : vector<16x1xi1>, vector<16x1xf32>
    %cst_33 = arith.constant 1.000000e+00 : f32
    %55 = vector.broadcast %cst_33 : f32 to vector<16x1xf32>
    %56 = arith.addf %55, %50 : vector<16x1xf32>
    %57 = tpu.reciprocal %56 {approx = true} : vector<16x1xf32> -> vector<16x1xf32>
    %58 = arith.mulf %54, %57 : vector<16x1xf32>
    %cst_34 = arith.constant 0.000000e+00 : f32
    %cst_35 = arith.constant 1.000000e+00 : f32
    %59 = vector.broadcast %cst_34 : f32 to vector<16x1xf32>
    %60 = arith.maximumf %59, %58 : vector<16x1xf32>
    %61 = vector.broadcast %cst_35 : f32 to vector<16x1xf32>
    %62 = arith.minimumf %61, %60 : vector<16x1xf32>
    %c0_36 = arith.constant 0 : index
    %c0_37 = arith.constant 0 : index
    %63 = vector.load %arg11[%c0_36, %c0_37] : memref<16x1xf32, #tpu.memory_space<vmem>>, vector<16x1xf32>
    tpu.vector_store %arg11[%c0_36, %c0_37], %62 {strides = array<i32>} : memref<16x1xf32, #tpu.memory_space<vmem>>, vector<16x1xf32>,
    return
  }
  func.func @transform_0(%arg0: i32) -> (i32, i32) {
    %c0_i32 = arith.constant 0 : i32
    %c0_i32_0 = arith.constant 0 : i32
    return %arg0, %c0_i32 : i32, i32
  }
  func.func @transform_1(%arg0: i32) -> (i32, i32) {
    %c0_i32 = arith.constant 0 : i32
    %c0_i32_0 = arith.constant 0 : i32
    return %arg0, %c0_i32 : i32, i32
  }
  func.func @transform_2(%arg0: i32) -> (i32, i32) {
    %c0_i32 = arith.constant 0 : i32
    %c0_i32_0 = arith.constant 0 : i32
    %c0_i32_1 = arith.constant 0 : i32
    return %c0_i32, %c0_i32_0 : i32, i32
  }
  func.func @transform_3(%arg0: i32) -> (i32, i32) {
    %c0_i32 = arith.constant 0 : i32
    %c0_i32_0 = arith.constant 0 : i32
    %c0_i32_1 = arith.constant 0 : i32
    return %c0_i32, %c0_i32_0 : i32, i32
  }
  func.func @transform_4(%arg0: i32) -> (i32, i32) {
    %c0_i32 = arith.constant 0 : i32
    %c0_i32_0 = arith.constant 0 : i32
    %c0_i32_1 = arith.constant 0 : i32
    return %c0_i32, %c0_i32_0 : i32, i32
  }
  func.func @transform_5(%arg0: i32) -> (i32, i32) {
    %c0_i32 = arith.constant 0 : i32
    %c0_i32_0 = arith.constant 0 : i32
    %c0_i32_1 = arith.constant 0 : i32
    return %c0_i32, %c0_i32_0 : i32, i32
  }
  func.func @transform_6(%arg0: i32) -> (i32, i32) {
    %c0_i32 = arith.constant 0 : i32
    %c0_i32_0 = arith.constant 0 : i32
    %c0_i32_1 = arith.constant 0 : i32
    return %c0_i32, %c0_i32_0 : i32, i32
  }
  func.func @transform_7(%arg0: i32) -> (i32, i32) {
    %c0_i32 = arith.constant 0 : i32
    %c0_i32_0 = arith.constant 0 : i32
    %c0_i32_1 = arith.constant 0 : i32
    return %c0_i32, %c0_i32_0 : i32, i32
  }
  func.func @transform_8(%arg0: i32) -> (i32, i32) {
    %c0_i32 = arith.constant 0 : i32
    %c0_i32_0 = arith.constant 0 : i32
    %c0_i32_1 = arith.constant 0 : i32
    return %c0_i32, %c0_i32_0 : i32, i32
  }
  func.func @transform_9(%arg0: i32) -> (i32, i32) {
    %c0_i32 = arith.constant 0 : i32
    %c0_i32_0 = arith.constant 0 : i32
    %c0_i32_1 = arith.constant 0 : i32
    return %c0_i32, %c0_i32_0 : i32, i32
  }
  func.func @transform_10(%arg0: i32) -> (i32, i32) {
    %c0_i32 = arith.constant 0 : i32
    %c0_i32_0 = arith.constant 0 : i32
    return %arg0, %c0_i32 : i32, i32
  }
  func.func @transform_11(%arg0: i32) -> (i32, i32) {
    %c0_i32 = arith.constant 0 : i32
    %c0_i32_0 = arith.constant 0 : i32
    return %arg0, %c0_i32 : i32, i32
  }
}

</mosaic_0001>

<llo_original>
// kernel: tpu_custom_call.1
$region0: #{tpu_custom_call.1}
  #allocation0 [shape = 'u32[]', space=smem, size = 0x4, offset = 0x4, fixed_abs, tag = 'smem constant byte address 0x4 - core index']
  #allocation1 [shape = 'u32[72,128]{1,0:T(1,128)}', space=vmem, size = 0x9000, scoped, tag = 'internal scratch']
  #allocation2 [shape = 'f32[1,1]{1,0:T(1,128)S(6)}', space=smem, size = 0x200, scoped, tag = 'scoped memory for tpu_custom_call.1']
  %s0 = inlined_call_operand.vmem [shape: bf16[16,16], index: 0, kind: input, shape index: {}]
  %s1 = inlined_call_operand.vmem [shape: bf16[16,8], index: 1, kind: input, shape index: {}]
  %s2 = inlined_call_operand.hbm [shape: bf16[24,512], index: 2, kind: input, shape index: {}]
  %s3 = inlined_call_operand.vmem [shape: f32[1,512], index: 3, kind: input, shape index: {}]
  %s4 = inlined_call_operand.hbm [shape: bf16[512,256], index: 4, kind: input, shape index: {}]
  %s5 = inlined_call_operand.vmem [shape: f32[1,256], index: 5, kind: input, shape index: {}]
  %s6 = inlined_call_operand.hbm [shape: bf16[256,128], index: 6, kind: input, shape index: {}]
  %s7 = inlined_call_operand.vmem [shape: f32[1,128], index: 7, kind: input, shape index: {}]
  %s8 = inlined_call_operand.vmem [shape: f32[1,128], index: 8, kind: input, shape index: {}]
  %s9 = inlined_call_operand.<no memory space> [shape: f32[1,1], index: 9, kind: input, shape index: {}]
  %s10 = inlined_call_operand.vmem [shape: f32[16,1], index: 10, kind: output, shape index: {0}]
  %s11 = inlined_call_operand.hbm [shape: f32[16,128], index: 11, kind: output, shape index: {1}]
  %12 = xla_tuple %s10, %s11
  %s13 = sld [smem:[#allocation0]]
  $region70: #{tpu_custom_call.1} parent=0
    _
  %s15 = ssub.s32 1, %s13
  %s16 = scalar_select 0, %s15, %s13
  %17 = sst [smem:[#allocation2]] %s9
  $region1: #{tpu_custom_call.1} parent=0
    #allocation3 [shape = 'u8[24576]{0}', space=vmem, size = 0x6000, scoped, tag = 'input window, operand 2, single buffered']
    #allocation4 [shape = 's32[1]{0}', space=sflag, size = 0x4, scoped, tag = 'scoped memory for tpu_custom_call.1']
    #allocation5 [shape = 's32[1]{0}', space=sflag, size = 0x4, scoped, tag = 'scoped memory for tpu_custom_call.1']
    #allocation6 [shape = 'u8[262144]{0}', space=vmem, size = 0x40000, scoped, tag = 'input window, operand 4, single buffered']
    #allocation7 [shape = 's32[1]{0}', space=sflag, size = 0x4, scoped, tag = 'scoped memory for tpu_custom_call.1']
    #allocation8 [shape = 'u8[65536]{0}', space=vmem, size = 0x10000, scoped, tag = 'input window, operand 6, single buffered']
    #allocation9 [shape = 'u8[8192]{0}', space=vmem, size = 0x2000, scoped, tag = 'output window, operand 1, single buffered']
    %18 = vsyncpa [#allocation4], 0
    %19 = vsyncpa [#allocation7], 0
    %20 = vsyncpa [#allocation5], 0
    // Predicated region
    $region2: #{tpu_custom_call.1} parent=1 // pred_check
      _
    $region3: #{tpu_custom_call.1} parent=1 // pred_check_branch
      %22 = sbr.rel (0) target = $region5
    $region4: #{tpu_custom_call.1} parent=1 // pred_region
      _
    $region5: #{tpu_custom_call.1} parent=1 // pred_fallthru
      _
    // Predicated region
    $region6: #{tpu_custom_call.1} parent=1 // pred_check
      _
    $region7: #{tpu_custom_call.1} parent=1 // pred_check_branch
      %24 = sbr.rel (0) target = $region9
    $region8: #{tpu_custom_call.1} parent=1 // pred_region
      _
    $region9: #{tpu_custom_call.1} parent=1 // pred_fallthru
      _
    // Predicated region
    $region10: #{tpu_custom_call.1} parent=1 // pred_check
      _
    $region11: #{tpu_custom_call.1} parent=1 // pred_check_branch
      %26 = sbr.rel (0) target = $region13
    $region12: #{tpu_custom_call.1} parent=1 // pred_region
      %28 = vsyncadd [#allocation4], 0
      %s29 = sshll.u32 %s2, 4
      %s30 = int_to_ptr.hbm [resolvable:$true] %s29
      %s31 = sshll.u32 [#allocation3], 4
      %s32 = int_to_ptr.vmem [resolvable:$true] %s31
      %37 = dma.hbm_to_vmem [thread:$0]  %s30, 768, %s32, [#allocation4], 256, 256, 16
    $region13: #{tpu_custom_call.1} parent=1 // pred_fallthru
      _
    // Predicated region
    $region14: #{tpu_custom_call.1} parent=1 // pred_check
      _
    $region15: #{tpu_custom_call.1} parent=1 // pred_check_branch
      %39 = sbr.rel (0) target = $region17
    $region16: #{tpu_custom_call.1} parent=1 // pred_region
      _
    $region17: #{tpu_custom_call.1} parent=1 // pred_fallthru
      _
    // Predicated region
    $region18: #{tpu_custom_call.1} parent=1 // pred_check
      _
    $region19: #{tpu_custom_call.1} parent=1 // pred_check_branch
      %41 = sbr.rel (0) target = $region21
    $region20: #{tpu_custom_call.1} parent=1 // pred_region
      %43 = vsyncadd [#allocation7], 0
      %s44 = sshll.u32 %s4, 4
      %s45 = int_to_ptr.hbm [resolvable:$true] %s44
      %s46 = sshll.u32 [#allocation6], 4
      %s47 = int_to_ptr.vmem [resolvable:$true] %s46
      %52 = dma.hbm_to_vmem [thread:$0]  %s45, 8192, %s47, [#allocation7], 128, 128, 8
    $region21: #{tpu_custom_call.1} parent=1 // pred_fallthru
      _
    // Predicated region
    $region22: #{tpu_custom_call.1} parent=1 // pred_check
      _
    $region23: #{tpu_custom_call.1} parent=1 // pred_check_branch
      %54 = sbr.rel (0) target = $region25
    $region24: #{tpu_custom_call.1} parent=1 // pred_region
      _
    $region25: #{tpu_custom_call.1} parent=1 // pred_fallthru
      _
    // Predicated region
    $region26: #{tpu_custom_call.1} parent=1 // pred_check
      _
    $region27: #{tpu_custom_call.1} parent=1 // pred_check_branch
      %56 = sbr.rel (0) target = $region29
    $region28: #{tpu_custom_call.1} parent=1 // pred_region
      %58 = vsyncadd [#allocation7], 0
      %s59 = sshll.u32 %s6, 4
      %s60 = int_to_ptr.hbm [resolvable:$true] %s59
      %s61 = sshll.u32 [#allocation8], 4
      %s62 = int_to_ptr.vmem [resolvable:$true] %s61
      %67 = dma.hbm_to_vmem [thread:$0]  %s60, 2048, %s62, [#allocation7], 64, 64, 4
    $region29: #{tpu_custom_call.1} parent=1 // pred_fallthru
      _
    // Predicated region
    $region30: #{tpu_custom_call.1} parent=1 // pred_check
      _
    $region31: #{tpu_custom_call.1} parent=1 // pred_check_branch
      %69 = sbr.rel (0) target = $region33
    $region32: #{tpu_custom_call.1} parent=1 // pred_region
      _
    $region33: #{tpu_custom_call.1} parent=1 // pred_fallthru
      _
    // Predicated region
    $region34: #{tpu_custom_call.1} parent=1 // pred_check
      _
    $region35: #{tpu_custom_call.1} parent=1 // pred_check_branch
      %71 = sbr.rel (0) target = $region37
    $region36: #{tpu_custom_call.1} parent=1 // pred_region
      _
    $region37: #{tpu_custom_call.1} parent=1 // pred_fallthru
      _
    // Predicated region
    $region38: #{tpu_custom_call.1} parent=1 // pred_check
      _
    $region39: #{tpu_custom_call.1} parent=1 // pred_check_branch
      %73 = sbr.rel (0) target = $region41
    $region40: #{tpu_custom_call.1} parent=1 // pred_region
      _
    $region41: #{tpu_custom_call.1} parent=1 // pred_fallthru
      _
    // Predicated region
    $region42: #{tpu_custom_call.1} parent=1 // pred_check
      _
    $region43: #{tpu_custom_call.1} parent=1 // pred_check_branch
      %75 = sbr.rel (0) target = $region45
    $region44: #{tpu_custom_call.1} parent=1 // pred_region
      %77 = dma.done [#allocation4], 768
    $region45: #{tpu_custom_call.1} parent=1 // pred_fallthru
      _
    // Predicated region
    $region46: #{tpu_custom_call.1} parent=1 // pred_check
      _
    $region47: #{tpu_custom_call.1} parent=1 // pred_check_branch
      %79 = sbr.rel (0) target = $region49
    $region48: #{tpu_custom_call.1} parent=1 // pred_region
      %81 = dma.done [#allocation7], 8192
    $region49: #{tpu_custom_call.1} parent=1 // pred_fallthru
      _
    // Predicated region
    $region50: #{tpu_custom_call.1} parent=1 // pred_check
      _
    $region51: #{tpu_custom_call.1} parent=1 // pred_check_branch
      %83 = sbr.rel (0) target = $region53
    $region52: #{tpu_custom_call.1} parent=1 // pred_region
      %85 = dma.done [#allocation7], 2048
    $region53: #{tpu_custom_call.1} parent=1 // pred_fallthru
      _
    %v87 = vld [vmem:[%s0] sm:$0xf]
    %v88 = vld [vmem:[%s0 + $0x4] sm:$0xf]
    %v89 = vld [vmem:[%s1] sm:$0xf]
    %v90 = vld [vmem:[%s1 + $0x4] sm:$0xf]
    %v93 = vunpack.c.l.b16 %v87
    %v94 = vunpack.c.l.b16 %v88
    %v95 = vpack.c.b16 %v94, %v93
    %v98 = vunpack.c.l.b16 %v89
    %v99 = vunpack.c.l.b16 %v90
    %v100 = vpack.c.b16 %v99, %v98
    %101 = vrot.lane.b32.xlu0 %v100, 16
    %v102 = vpop.permute.xlu0 %101
    %vm103 = vcmask 130048
    %v106 = vsel %vm103, %v95, %v102
    %v107 = vld [vmem:[#allocation3] sm:$0xff]
    %v108 = vld [vmem:[#allocation3 + $0x8] sm:$0xff]
    %v109 = vld [vmem:[#allocation3 + $0x10] sm:$0xff]
    %v110 = vld [vmem:[#allocation3 + $0x18] sm:$0xff]
    %v111 = vld [vmem:[#allocation3 + $0x20] sm:$0xff]
    %v112 = vld [vmem:[#allocation3 + $0x28] sm:$0xff]
    %v113 = vld [vmem:[%s3] sm:$0xf]
    %v115 = vperm.slane %v113, 0
    %v116 = vperm.slane %v113, 1
    %v117 = vperm.slane %v113, 2
    %v118 = vperm.slane %v113, 3
    %v129 = vunpack.c.l.b16 %v107
    %v130 = vunpack.c.h.b16 %v107
    %v131 = vunpack.c.l.b16 %v108
    %v132 = vunpack.c.h.b16 %v108
    %v133 = vunpack.c.l.b16 %v109
    %v134 = vunpack.c.h.b16 %v109
    %v135 = vunpack.c.l.b16 %v110
    %v136 = vunpack.c.h.b16 %v110
    %v137 = vunpack.c.l.b16 %v111
    %v138 = vunpack.c.h.b16 %v111
    %v139 = vunpack.c.l.b16 %v112
    %v140 = vunpack.c.h.b16 %v112
    %v141 = vpack.c.b16 %v133, %v129
    %v142 = vpack.c.b16 %v134, %v130
    %v143 = vpack.c.b16 %v135, %v131
    %v144 = vpack.c.b16 %v136, %v132
    %v145 = vpack.c.b16 %v137, %v137
    %v146 = vpack.c.b16 %v138, %v138
    %v147 = vpack.c.b16 %v139, %v139
    %v148 = vpack.c.b16 %v140, %v140
    %vm153 = vcmask 195584
    %v154 = vsel %vm153, %v106, 0
    %vm156 = vcmask 1043456
    %v158 = vsel %vm156, %v145, 0
    %v161 = vsel %vm156, %v146, 0
    %v164 = vsel %vm156, %v147, 0
    %v167 = vsel %vm156, %v148, 0
    %169 = vmatpush.bf16.msra.mxu0 0
    %170 = vmatpush.bf16.msra.mxu0 0
    %171 = vmatpush.bf16.msra.mxu0 0
    %172 = vmatpush.bf16.msra.mxu0 0
    %173 = vmatpush.bf16.msra.mxu0 0
    %174 = vmatpush.bf16.msra.mxu0 0
    %175 = vmatpush.bf16.msra.mxu0 %v158
    %176 = vmatpush.bf16.msra.mxu0 %v141
    %177 = vmatmul.bf16.gmra.mxu0 %v154
    %v178 = vpop.f32.mrf.mxu0
    %v179 = vadd.f32 %v115, %v178
    %v180 = vpop.f32.mrf.mxu0
    %v181 = vadd.f32 %v115, %v180
    %182 = vdwg.mxu0
    %183 = vmatpush.bf16.msra.mxu0 0
    %184 = vmatpush.bf16.msra.mxu0 0
    %185 = vmatpush.bf16.msra.mxu0 0
    %186 = vmatpush.bf16.msra.mxu0 0
    %187 = vmatpush.bf16.msra.mxu0 0
    %188 = vmatpush.bf16.msra.mxu0 0
    %189 = vmatpush.bf16.msra.mxu0 %v161
    %190 = vmatpush.bf16.msra.mxu0 %v142
    %191 = vmatmul.bf16.gmra.mxu0 %v154
    %v192 = vpop.f32.mrf.mxu0
    %v193 = vadd.f32 %v116, %v192
    %v194 = vpop.f32.mrf.mxu0
    %v195 = vadd.f32 %v116, %v194
    %196 = vdwg.mxu0
    %197 = vmatpush.bf16.msra.mxu0 0
    %198 = vmatpush.bf16.msra.mxu0 0
    %199 = vmatpush.bf16.msra.mxu0 0
    %200 = vmatpush.bf16.msra.mxu0 0
    %201 = vmatpush.bf16.msra.mxu0 0
    %202 = vmatpush.bf16.msra.mxu0 0
    %203 = vmatpush.bf16.msra.mxu0 %v164
    %204 = vmatpush.bf16.msra.mxu0 %v143
    %205 = vmatmul.bf16.gmra.mxu0 %v154
    %v206 = vpop.f32.mrf.mxu0
    %v207 = vadd.f32 %v117, %v206
    %v208 = vpop.f32.mrf.mxu0
    %v209 = vadd.f32 %v117, %v208
    %210 = vdwg.mxu0
    %211 = vmatpush.bf16.msra.mxu0 0
    %212 = vmatpush.bf16.msra.mxu0 0
    %213 = vmatpush.bf16.msra.mxu0 0
    %214 = vmatpush.bf16.msra.mxu0 0
    %215 = vmatpush.bf16.msra.mxu0 0
    %216 = vmatpush.bf16.msra.mxu0 0
    %217 = vmatpush.bf16.msra.mxu0 %v167
    %218 = vmatpush.bf16.msra.mxu0 %v144
    %219 = vmatmul.bf16.gmra.mxu0 %v154
    %v220 = vpop.f32.mrf.mxu0
    %v221 = vadd.f32 %v118, %v220
    %v222 = vpop.f32.mrf.mxu0
    %v223 = vadd.f32 %v118, %v222
    %224 = vdwg.mxu0
    %v225 = vpack.c.bf16 %v193, %v179
    %v226 = vpack.c.bf16 %v221, %v207
    %v227 = vpack.c.bf16 %v195, %v181
    %v228 = vpack.c.bf16 %v223, %v209
    %v229 = vunpack.c.l.bf16 %v225
    %v230 = vunpack.c.h.bf16 %v225
    %v231 = vunpack.c.l.bf16 %v226
    %v232 = vunpack.c.h.bf16 %v226
    %v233 = vunpack.c.l.bf16 %v227
    %v234 = vunpack.c.h.bf16 %v227
    %v235 = vunpack.c.l.bf16 %v228
    %v236 = vunpack.c.h.bf16 %v228
    %vm237 = vcmp.gt.f32.partialorder %v229, 0.0
    %vm238 = vcmp.gt.f32.partialorder %v230, 0.0
    %vm239 = vcmp.gt.f32.partialorder %v231, 0.0
    %vm240 = vcmp.gt.f32.partialorder %v232, 0.0
    %vm241 = vcmp.gt.f32.partialorder %v233, 0.0
    %vm242 = vcmp.gt.f32.partialorder %v234, 0.0
    %vm243 = vcmp.gt.f32.partialorder %v235, 0.0
    %vm244 = vcmp.gt.f32.partialorder %v236, 0.0
    %v245 = vmul.f32 %v229, 0.20019531
    %v246 = vmul.f32 %v230, 0.20019531
    %v247 = vmul.f32 %v231, 0.20019531
    %v248 = vmul.f32 %v232, 0.20019531
    %v249 = vmul.f32 %v233, 0.20019531
    %v250 = vmul.f32 %v234, 0.20019531
    %v251 = vmul.f32 %v235, 0.20019531
    %v252 = vmul.f32 %v236, 0.20019531
    %v253 = vpack.c.bf16 %v246, %v245
    %v254 = vpack.c.bf16 %v248, %v247
    %v255 = vpack.c.bf16 %v250, %v249
    %v256 = vpack.c.bf16 %v252, %v251
    %vm257 = vmpackc.low %vm238, %vm237
    %vm258 = vmpackc.low %vm240, %vm239
    %vm259 = vmpackc.low %vm242, %vm241
    %vm260 = vmpackc.low %vm244, %vm243
    %v261 = vsel %vm257, %v225, %v253
    %v262 = vsel %vm258, %v226, %v254
    %v263 = vsel %vm259, %v227, %v255
    %v264 = vsel %vm260, %v228, %v256
    %v265 = vld [vmem:[#allocation6] sm:$0xff]
    %v266 = vld [vmem:[#allocation6 + $0x8] sm:$0xff]
    %v267 = vld [vmem:[#allocation6 + $0x10] sm:$0xff]
    %v268 = vld [vmem:[#allocation6 + $0x18] sm:$0xff]
    %v269 = vld [vmem:[#allocation6 + $0x20] sm:$0xff]
    %v270 = vld [vmem:[#allocation6 + $0x28] sm:$0xff]
    %v271 = vld [vmem:[#allocation6 + $0x30] sm:$0xff]
    %v272 = vld [vmem:[#allocation6 + $0x38] sm:$0xff]
    %v273 = vld [vmem:[#allocation6 + $0x40] sm:$0xff]
    %v274 = vld [vmem:[#allocation6 + $0x48] sm:$0xff]
    %v275 = vld [vmem:[#allocation6 + $0x50] sm:$0xff]
    %v276 = vld [vmem:[#allocation6 + $0x58] sm:$0xff]
    %v277 = vld [vmem:[#allocation6 + $0x60] sm:$0xff]
    %v278 = vld [vmem:[#allocation6 + $0x68] sm:$0xff]
    %v279 = vld [vmem:[#allocation6 + $0x70] sm:$0xff]
    %v280 = vld [vmem:[#allocation6 + $0x78] sm:$0xff]
    %v281 = vld [vmem:[#allocation6 + $0x80] sm:$0xff]
    %v282 = vld [vmem:[#allocation6 + $0x88] sm:$0xff]
    %v283 = vld [vmem:[#allocation6 + $0x90] sm:$0xff]
    %v284 = vld [vmem:[#allocation6 + $0x98] sm:$0xff]
    %v285 = vld [vmem:[#allocation6 + $0xa0] sm:$0xff]
    %v286 = vld [vmem:[#allocation6 + $0xa8] sm:$0xff]
    %v287 = vld [vmem:[#allocation6 + $0xb0] sm:$0xff]
    %v288 = vld [vmem:[#allocation6 + $0xb8] sm:$0xff]
    %v289 = vld [vmem:[#allocation6 + $0xc0] sm:$0xff]
    %v290 = vld [vmem:[#allocation6 + $0xc8] sm:$0xff]
    %v291 = vld [vmem:[#allocation6 + $0xd0] sm:$0xff]
    %v292 = vld [vmem:[#allocation6 + $0xd8] sm:$0xff]
    %v293 = vld [vmem:[#allocation6 + $0xe0] sm:$0xff]
    %v294 = vld [vmem:[#allocation6 + $0xe8] sm:$0xff]
    %v295 = vld [vmem:[#allocation6 + $0xf0] sm:$0xff]
    %v296 = vld [vmem:[#allocation6 + $0xf8] sm:$0xff]
    %v297 = vld [vmem:[#allocation6 + $0x100] sm:$0xff]
    %v298 = vld [vmem:[#allocation6 + $0x108] sm:$0xff]
    %v299 = vld [vmem:[#allocation6 + $0x110] sm:$0xff]
    %v300 = vld [vmem:[#allocation6 + $0x118] sm:$0xff]
    %v301 = vld [vmem:[#allocation6 + $0x120] sm:$0xff]
    %v302 = vld [vmem:[#allocation6 + $0x128] sm:$0xff]
    %v303 = vld [vmem:[#allocation6 + $0x130] sm:$0xff]
    %v304 = vld [vmem:[#allocation6 + $0x138] sm:$0xff]
    %v305 = vld [vmem:[#allocation6 + $0x140] sm:$0xff]
    %v306 = vld [vmem:[#allocation6 + $0x148] sm:$0xff]
    %v307 = vld [vmem:[#allocation6 + $0x150] sm:$0xff]
    %v308 = vld [vmem:[#allocation6 + $0x158] sm:$0xff]
    %v309 = vld [vmem:[#allocation6 + $0x160] sm:$0xff]
    %v310 = vld [vmem:[#allocation6 + $0x168] sm:$0xff]
    %v311 = vld [vmem:[#allocation6 + $0x170] sm:$0xff]
    %v312 = vld [vmem:[#allocation6 + $0x178] sm:$0xff]
    %v313 = vld [vmem:[#allocation6 + $0x180] sm:$0xff]
    %v314 = vld [vmem:[#allocation6 + $0x188] sm:$0xff]
    %v315 = vld [vmem:[#allocation6 + $0x190] sm:$0xff]
    %v316 = vld [vmem:[#allocation6 + $0x198] sm:$0xff]
    %v317 = vld [vmem:[#allocation6 + $0x1a0] sm:$0xff]
    %v318 = vld [vmem:[#allocation6 + $0x1a8] sm:$0xff]
    %v319 = vld [vmem:[#allocation6 + $0x1b0] sm:$0xff]
    %v320 = vld [vmem:[#allocation6 + $0x1b8] sm:$0xff]
    %v321 = vld [vmem:[#allocation6 + $0x1c0] sm:$0xff]
    %v322 = vld [vmem:[#allocation6 + $0x1c8] sm:$0xff]
    %v323 = vld [vmem:[#allocation6 + $0x1d0] sm:$0xff]
    %v324 = vld [vmem:[#allocation6 + $0x1d8] sm:$0xff]
    %v325 = vld [vmem:[#allocation6 + $0x1e0] sm:$0xff]
    %v326 = vld [vmem:[#allocation6 + $0x1e8] sm:$0xff]
    %v327 = vld [vmem:[#allocation6 + $0x1f0] sm:$0xff]
    %v328 = vld [vmem:[#allocation6 + $0x1f8] sm:$0xff]
    %v329 = vld [vmem:[%s5] sm:$0x3]
    %v331 = vperm.slane %v329, 0
    %v332 = vperm.slane %v329, 1
    %v339 = vunpack.c.l.b16 %v261
    %v340 = vunpack.c.h.b16 %v261
    %v341 = vunpack.c.l.b16 %v262
    %v342 = vunpack.c.h.b16 %v262
    %v343 = vunpack.c.l.b16 %v263
    %v344 = vunpack.c.h.b16 %v263
    %v345 = vunpack.c.l.b16 %v264
    %v346 = vunpack.c.h.b16 %v264
    %v347 = vpack.c.b16 %v343, %v339
    %v348 = vpack.c.b16 %v344, %v340
    %v349 = vpack.c.b16 %v345, %v341
    %v350 = vpack.c.b16 %v346, %v342
    %v419 = vunpack.c.l.b16 %v265
    %v420 = vunpack.c.h.b16 %v265
    %v421 = vunpack.c.l.b16 %v266
    %v422 = vunpack.c.h.b16 %v266
    %v423 = vunpack.c.l.b16 %v267
    %v424 = vunpack.c.h.b16 %v267
    %v425 = vunpack.c.l.b16 %v268
    %v426 = vunpack.c.h.b16 %v268
    %v427 = vunpack.c.l.b16 %v269
    %v428 = vunpack.c.h.b16 %v269
    %v429 = vunpack.c.l.b16 %v270
    %v430 = vunpack.c.h.b16 %v270
    %v431 = vunpack.c.l.b16 %v271
    %v432 = vunpack.c.h.b16 %v271
    %v433 = vunpack.c.l.b16 %v272
    %v434 = vunpack.c.h.b16 %v272
    %v435 = vunpack.c.l.b16 %v273
    %v436 = vunpack.c.h.b16 %v273
    %v437 = vunpack.c.l.b16 %v274
    %v438 = vunpack.c.h.b16 %v274
    %v439 = vunpack.c.l.b16 %v275
    %v440 = vunpack.c.h.b16 %v275
    %v441 = vunpack.c.l.b16 %v276
    %v442 = vunpack.c.h.b16 %v276
    %v443 = vunpack.c.l.b16 %v277
    %v444 = vunpack.c.h.b16 %v277
    %v445 = vunpack.c.l.b16 %v278
    %v446 = vunpack.c.h.b16 %v278
    %v447 = vunpack.c.l.b16 %v279
    %v448 = vunpack.c.h.b16 %v279
    %v449 = vunpack.c.l.b16 %v280
    %v450 = vunpack.c.h.b16 %v280
    %v451 = vunpack.c.l.b16 %v281
    %v452 = vunpack.c.h.b16 %v281
    %v453 = vunpack.c.l.b16 %v282
    %v454 = vunpack.c.h.b16 %v282
    %v455 = vunpack.c.l.b16 %v283
    %v456 = vunpack.c.h.b16 %v283
    %v457 = vunpack.c.l.b16 %v284
    %v458 = vunpack.c.h.b16 %v284
    %v459 = vunpack.c.l.b16 %v285
    %v460 = vunpack.c.h.b16 %v285
    %v461 = vunpack.c.l.b16 %v286
    %v462 = vunpack.c.h.b16 %v286
    %v463 = vunpack.c.l.b16 %v287
    %v464 = vunpack.c.h.b16 %v287
    %v465 = vunpack.c.l.b16 %v288
    %v466 = vunpack.c.h.b16 %v288
    %v467 = vunpack.c.l.b16 %v289
    %v468 = vunpack.c.h.b16 %v289
    %v469 = vunpack.c.l.b16 %v290
    %v470 = vunpack.c.h.b16 %v290
    %v471 = vunpack.c.l.b16 %v291
    %v472 = vunpack.c.h.b16 %v291
    %v473 = vunpack.c.l.b16 %v292
    %v474 = vunpack.c.h.b16 %v292
    %v475 = vunpack.c.l.b16 %v293
    %v476 = vunpack.c.h.b16 %v293
    %v477 = vunpack.c.l.b16 %v294
    %v478 = vunpack.c.h.b16 %v294
    %v479 = vunpack.c.l.b16 %v295
    %v480 = vunpack.c.h.b16 %v295
    %v481 = vunpack.c.l.b16 %v296
    %v482 = vunpack.c.h.b16 %v296
    %v483 = vunpack.c.l.b16 %v297
    %v484 = vunpack.c.h.b16 %v297
    %v485 = vunpack.c.l.b16 %v298
    %v486 = vunpack.c.h.b16 %v298
    %v487 = vunpack.c.l.b16 %v299
    %v488 = vunpack.c.h.b16 %v299
    %v489 = vunpack.c.l.b16 %v300
    %v490 = vunpack.c.h.b16 %v300
    %v491 = vunpack.c.l.b16 %v301
    %v492 = vunpack.c.h.b16 %v301
    %v493 = vunpack.c.l.b16 %v302
    %v494 = vunpack.c.h.b16 %v302
    %v495 = vunpack.c.l.b16 %v303
    %v496 = vunpack.c.h.b16 %v303
    %v497 = vunpack.c.l.b16 %v304
    %v498 = vunpack.c.h.b16 %v304
    %v499 = vunpack.c.l.b16 %v305
    %v500 = vunpack.c.h.b16 %v305
    %v501 = vunpack.c.l.b16 %v306
    %v502 = vunpack.c.h.b16 %v306
    %v503 = vunpack.c.l.b16 %v307
    %v504 = vunpack.c.h.b16 %v307
    %v505 = vunpack.c.l.b16 %v308
    %v506 = vunpack.c.h.b16 %v308
    %v507 = vunpack.c.l.b16 %v309
    %v508 = vunpack.c.h.b16 %v309
    %v509 = vunpack.c.l.b16 %v310
    %v510 = vunpack.c.h.b16 %v310
    %v511 = vunpack.c.l.b16 %v311
    %v512 = vunpack.c.h.b16 %v311
    %v513 = vunpack.c.l.b16 %v312
    %v514 = vunpack.c.h.b16 %v312
    %v515 = vunpack.c.l.b16 %v313
    %v516 = vunpack.c.h.b16 %v313
    %v517 = vunpack.c.l.b16 %v314
    %v518 = vunpack.c.h.b16 %v314
    %v519 = vunpack.c.l.b16 %v315
    %v520 = vunpack.c.h.b16 %v315
    %v521 = vunpack.c.l.b16 %v316
    %v522 = vunpack.c.h.b16 %v316
    %v523 = vunpack.c.l.b16 %v317
    %v524 = vunpack.c.h.b16 %v317
    %v525 = vunpack.c.l.b16 %v318
    %v526 = vunpack.c.h.b16 %v318
    %v527 = vunpack.c.l.b16 %v319
    %v528 = vunpack.c.h.b16 %v319
    %v529 = vunpack.c.l.b16 %v320
    %v530 = vunpack.c.h.b16 %v320
    %v531 = vunpack.c.l.b16 %v321
    %v532 = vunpack.c.h.b16 %v321
    %v533 = vunpack.c.l.b16 %v322
    %v534 = vunpack.c.h.b16 %v322
    %v535 = vunpack.c.l.b16 %v323
    %v536 = vunpack.c.h.b16 %v323
    %v537 = vunpack.c.l.b16 %v324
    %v538 = vunpack.c.h.b16 %v324
    %v539 = vunpack.c.l.b16 %v325
    %v540 = vunpack.c.h.b16 %v325
    %v541 = vunpack.c.l.b16 %v326
    %v542 = vunpack.c.h.b16 %v326
    %v543 = vunpack.c.l.b16 %v327
    %v544 = vunpack.c.h.b16 %v327
    %v545 = vunpack.c.l.b16 %v328
    %v546 = vunpack.c.h.b16 %v328
    %v547 = vpack.c.b16 %v421, %v419
    %v548 = vpack.c.b16 %v422, %v420
    %v549 = vpack.c.b16 %v425, %v423
    %v550 = vpack.c.b16 %v426, %v424
    %v551 = vpack.c.b16 %v429, %v427
    %v552 = vpack.c.b16 %v430, %v428
    %v553 = vpack.c.b16 %v433, %v431
    %v554 = vpack.c.b16 %v434, %v432
    %v555 = vpack.c.b16 %v437, %v435
    %v556 = vpack.c.b16 %v438, %v436
    %v557 = vpack.c.b16 %v441, %v439
    %v558 = vpack.c.b16 %v442, %v440
    %v559 = vpack.c.b16 %v445, %v443
    %v560 = vpack.c.b16 %v446, %v444
    %v561 = vpack.c.b16 %v449, %v447
    %v562 = vpack.c.b16 %v450, %v448
    %v563 = vpack.c.b16 %v453, %v451
    %v564 = vpack.c.b16 %v454, %v452
    %v565 = vpack.c.b16 %v457, %v455
    %v566 = vpack.c.b16 %v458, %v456
    %v567 = vpack.c.b16 %v461, %v459
    %v568 = vpack.c.b16 %v462, %v460
    %v569 = vpack.c.b16 %v465, %v463
    %v570 = vpack.c.b16 %v466, %v464
    %v571 = vpack.c.b16 %v469, %v467
    %v572 = vpack.c.b16 %v470, %v468
    %v573 = vpack.c.b16 %v473, %v471
    %v574 = vpack.c.b16 %v474, %v472
    %v575 = vpack.c.b16 %v477, %v475
    %v576 = vpack.c.b16 %v478, %v476
    %v577 = vpack.c.b16 %v481, %v479
    %v578 = vpack.c.b16 %v482, %v480
    %v579 = vpack.c.b16 %v485, %v483
    %v580 = vpack.c.b16 %v486, %v484
    %v581 = vpack.c.b16 %v489, %v487
    %v582 = vpack.c.b16 %v490, %v488
    %v583 = vpack.c.b16 %v493, %v491
    %v584 = vpack.c.b16 %v494, %v492
    %v585 = vpack.c.b16 %v497, %v495
    %v586 = vpack.c.b16 %v498, %v496
    %v587 = vpack.c.b16 %v501, %v499
    %v588 = vpack.c.b16 %v502, %v500
    %v589 = vpack.c.b16 %v505, %v503
    %v590 = vpack.c.b16 %v506, %v504
    %v591 = vpack.c.b16 %v509, %v507
    %v592 = vpack.c.b16 %v510, %v508
    %v593 = vpack.c.b16 %v513, %v511
    %v594 = vpack.c.b16 %v514, %v512
    %v595 = vpack.c.b16 %v517, %v515
    %v596 = vpack.c.b16 %v518, %v516
    %v597 = vpack.c.b16 %v521, %v519
    %v598 = vpack.c.b16 %v522, %v520
    %v599 = vpack.c.b16 %v525, %v523
    %v600 = vpack.c.b16 %v526, %v524
    %v601 = vpack.c.b16 %v529, %v527
    %v602 = vpack.c.b16 %v530, %v528
    %v603 = vpack.c.b16 %v533, %v531
    %v604 = vpack.c.b16 %v534, %v532
    %v605 = vpack.c.b16 %v537, %v535
    %v606 = vpack.c.b16 %v538, %v536
    %v607 = vpack.c.b16 %v541, %v539
    %v608 = vpack.c.b16 %v542, %v540
    %v609 = vpack.c.b16 %v545, %v543
    %v610 = vpack.c.b16 %v546, %v544
    %675 = vmatpush.bf16.msra.mxu0 %v561
    %676 = vmatpush.bf16.msra.mxu0 %v559
    %677 = vmatpush.bf16.msra.mxu0 %v557
    %678 = vmatpush.bf16.msra.mxu0 %v555
    %679 = vmatpush.bf16.msra.mxu0 %v553
    %680 = vmatpush.bf16.msra.mxu0 %v551
    %681 = vmatpush.bf16.msra.mxu0 %v549
    %682 = vmatpush.bf16.msra.mxu0 %v547
    %683 = vmatmul.bf16.gmra.mxu0 %v347
    %v684 = vpop.f32.mrf.mxu0
    %v685 = vadd.f32 %v331, %v684
    %v686 = vpop.f32.mrf.mxu0
    %v687 = vadd.f32 %v331, %v686
    %688 = vdwg.mxu0
    %689 = vmatpush.bf16.msra.mxu0 %v577
    %690 = vmatpush.bf16.msra.mxu0 %v575
    %691 = vmatpush.bf16.msra.mxu0 %v573
    %692 = vmatpush.bf16.msra.mxu0 %v571
    %693 = vmatpush.bf16.msra.mxu0 %v569
    %694 = vmatpush.bf16.msra.mxu0 %v567
    %695 = vmatpush.bf16.msra.mxu0 %v565
    %696 = vmatpush.bf16.msra.mxu0 %v563
    %697 = vmatmul.bf16.gmra.mxu0 %v348
    %v698 = vpop.f32.mrf.mxu0
    %v699 = vadd.f32 %v685, %v698
    %v700 = vpop.f32.mrf.mxu0
    %v701 = vadd.f32 %v687, %v700
    %702 = vdwg.mxu0
    %703 = vmatpush.bf16.msra.mxu0 %v593
    %704 = vmatpush.bf16.msra.mxu0 %v591
    %705 = vmatpush.bf16.msra.mxu0 %v589
    %706 = vmatpush.bf16.msra.mxu0 %v587
    %707 = vmatpush.bf16.msra.mxu0 %v585
    %708 = vmatpush.bf16.msra.mxu0 %v583
    %709 = vmatpush.bf16.msra.mxu0 %v581
    %710 = vmatpush.bf16.msra.mxu0 %v579
    %711 = vmatmul.bf16.gmra.mxu0 %v349
    %v712 = vpop.f32.mrf.mxu0
    %v713 = vadd.f32 %v699, %v712
    %v714 = vpop.f32.mrf.mxu0
    %v715 = vadd.f32 %v701, %v714
    %716 = vdwg.mxu0
    %717 = vmatpush.bf16.msra.mxu0 %v609
    %718 = vmatpush.bf16.msra.mxu0 %v607
    %719 = vmatpush.bf16.msra.mxu0 %v605
    %720 = vmatpush.bf16.msra.mxu0 %v603
    %721 = vmatpush.bf16.msra.mxu0 %v601
    %722 = vmatpush.bf16.msra.mxu0 %v599
    %723 = vmatpush.bf16.msra.mxu0 %v597
    %724 = vmatpush.bf16.msra.mxu0 %v595
    %725 = vmatmul.bf16.gmra.mxu0 %v350
    %v726 = vpop.f32.mrf.mxu0
    %v727 = vadd.f32 %v713, %v726
    %v728 = vpop.f32.mrf.mxu0
    %v729 = vadd.f32 %v715, %v728
    %730 = vdwg.mxu0
    %731 = vmatpush.bf16.msra.mxu0 %v562
    %732 = vmatpush.bf16.msra.mxu0 %v560
    %733 = vmatpush.bf16.msra.mxu0 %v558
    %734 = vmatpush.bf16.msra.mxu0 %v556
    %735 = vmatpush.bf16.msra.mxu0 %v554
    %736 = vmatpush.bf16.msra.mxu0 %v552
    %737 = vmatpush.bf16.msra.mxu0 %v550
    %738 = vmatpush.bf16.msra.mxu0 %v548
    %739 = vmatmul.bf16.gmra.mxu0 %v347
    %v740 = vpop.f32.mrf.mxu0
    %v741 = vadd.f32 %v332, %v740
    %v742 = vpop.f32.mrf.mxu0
    %v743 = vadd.f32 %v332, %v742
    %744 = vdwg.mxu0
    %745 = vmatpush.bf16.msra.mxu0 %v578
    %746 = vmatpush.bf16.msra.mxu0 %v576
    %747 = vmatpush.bf16.msra.mxu0 %v574
    %748 = vmatpush.bf16.msra.mxu0 %v572
    %749 = vmatpush.bf16.msra.mxu0 %v570
    %750 = vmatpush.bf16.msra.mxu0 %v568
    %751 = vmatpush.bf16.msra.mxu0 %v566
    %752 = vmatpush.bf16.msra.mxu0 %v564
    %753 = vmatmul.bf16.gmra.mxu0 %v348
    %v754 = vpop.f32.mrf.mxu0
    %v755 = vadd.f32 %v741, %v754
    %v756 = vpop.f32.mrf.mxu0
    %v757 = vadd.f32 %v743, %v756
    %758 = vdwg.mxu0
    %759 = vmatpush.bf16.msra.mxu0 %v594
    %760 = vmatpush.bf16.msra.mxu0 %v592
    %761 = vmatpush.bf16.msra.mxu0 %v590
    %762 = vmatpush.bf16.msra.mxu0 %v588
    %763 = vmatpush.bf16.msra.mxu0 %v586
    %764 = vmatpush.bf16.msra.mxu0 %v584
    %765 = vmatpush.bf16.msra.mxu0 %v582
    %766 = vmatpush.bf16.msra.mxu0 %v580
    %767 = vmatmul.bf16.gmra.mxu0 %v349
    %v768 = vpop.f32.mrf.mxu0
    %v769 = vadd.f32 %v755, %v768
    %v770 = vpop.f32.mrf.mxu0
    %v771 = vadd.f32 %v757, %v770
    %772 = vdwg.mxu0
    %773 = vmatpush.bf16.msra.mxu0 %v610
    %774 = vmatpush.bf16.msra.mxu0 %v608
    %775 = vmatpush.bf16.msra.mxu0 %v606
    %776 = vmatpush.bf16.msra.mxu0 %v604
    %777 = vmatpush.bf16.msra.mxu0 %v602
    %778 = vmatpush.bf16.msra.mxu0 %v600
    %779 = vmatpush.bf16.msra.mxu0 %v598
    %780 = vmatpush.bf16.msra.mxu0 %v596
    %781 = vmatmul.bf16.gmra.mxu0 %v350
    %v782 = vpop.f32.mrf.mxu0
    %v783 = vadd.f32 %v769, %v782
    %v784 = vpop.f32.mrf.mxu0
    %v785 = vadd.f32 %v771, %v784
    %786 = vdwg.mxu0
    %v787 = vpack.c.bf16 %v783, %v727
    %v788 = vpack.c.bf16 %v785, %v729
    %v789 = vunpack.c.l.bf16 %v787
    %v790 = vunpack.c.h.bf16 %v787
    %v791 = vunpack.c.l.bf16 %v788
    %v792 = vunpack.c.h.bf16 %v788
    %vm793 = vcmp.gt.f32.partialorder %v789, 0.0
    %vm794 = vcmp.gt.f32.partialorder %v790, 0.0
    %vm795 = vcmp.gt.f32.partialorder %v791, 0.0
    %vm796 = vcmp.gt.f32.partialorder %v792, 0.0
    %v797 = vmul.f32 %v789, 0.20019531
    %v798 = vmul.f32 %v790, 0.20019531
    %v799 = vmul.f32 %v791, 0.20019531
    %v800 = vmul.f32 %v792, 0.20019531
    %v801 = vpack.c.bf16 %v798, %v797
    %v802 = vpack.c.bf16 %v800, %v799
    %vm803 = vmpackc.low %vm794, %vm793
    %vm804 = vmpackc.low %vm796, %vm795
    %v805 = vsel %vm803, %v787, %v801
    %v806 = vsel %vm804, %v788, %v802
    %v807 = vld [vmem:[#allocation8] sm:$0xf]
    %v808 = vld [vmem:[#allocation8 + $0x4] sm:$0xf]
    %v809 = vld [vmem:[#allocation8 + $0x8] sm:$0xf]
    %v810 = vld [vmem:[#allocation8 + $0xc] sm:$0xf]
    %v811 = vld [vmem:[#allocation8 + $0x10] sm:$0xf]
    %v812 = vld [vmem:[#allocation8 + $0x14] sm:$0xf]
    %v813 = vld [vmem:[#allocation8 + $0x18] sm:$0xf]
    %v814 = vld [vmem:[#allocation8 + $0x1c] sm:$0xf]
    %v815 = vld [vmem:[#allocation8 + $0x20] sm:$0xf]
    %v816 = vld [vmem:[#allocation8 + $0x24] sm:$0xf]
    %v817 = vld [vmem:[#allocation8 + $0x28] sm:$0xf]
    %v818 = vld [vmem:[#allocation8 + $0x2c] sm:$0xf]
    %v819 = vld [vmem:[#allocation8 + $0x30] sm:$0xf]
    %v820 = vld [vmem:[#allocation8 + $0x34] sm:$0xf]
    %v821 = vld [vmem:[#allocation8 + $0x38] sm:$0xf]
    %v822 = vld [vmem:[#allocation8 + $0x3c] sm:$0xf]
    %v823 = vld [vmem:[#allocation8 + $0x40] sm:$0xf]
    %v824 = vld [vmem:[#allocation8 + $0x44] sm:$0xf]
    %v825 = vld [vmem:[#allocation8 + $0x48] sm:$0xf]
    %v826 = vld [vmem:[#allocation8 + $0x4c] sm:$0xf]
    %v827 = vld [vmem:[#allocation8 + $0x50] sm:$0xf]
    %v828 = vld [vmem:[#allocation8 + $0x54] sm:$0xf]
    %v829 = vld [vmem:[#allocation8 + $0x58] sm:$0xf]
    %v830 = vld [vmem:[#allocation8 + $0x5c] sm:$0xf]
    %v831 = vld [vmem:[#allocation8 + $0x60] sm:$0xf]
    %v832 = vld [vmem:[#allocation8 + $0x64] sm:$0xf]
    %v833 = vld [vmem:[#allocation8 + $0x68] sm:$0xf]
    %v834 = vld [vmem:[#allocation8 + $0x6c] sm:$0xf]
    %v835 = vld [vmem:[#allocation8 + $0x70] sm:$0xf]
    %v836 = vld [vmem:[#allocation8 + $0x74] sm:$0xf]
    %v837 = vld [vmem:[#allocation8 + $0x78] sm:$0xf]
    %v838 = vld [vmem:[#allocation8 + $0x7c] sm:$0xf]
    %v839 = vld [vmem:[%s7] sm:$0x1]
    %v841 = vperm.slane %v839, 0
    %v845 = vunpack.c.l.b16 %v805
    %v846 = vunpack.c.h.b16 %v805
    %v847 = vunpack.c.l.b16 %v806
    %v848 = vunpack.c.h.b16 %v806
    %v849 = vpack.c.b16 %v847, %v845
    %v850 = vpack.c.b16 %v848, %v846
    %v885 = vunpack.c.l.b16 %v807
    %v886 = vunpack.c.l.b16 %v808
    %v887 = vunpack.c.l.b16 %v809
    %v888 = vunpack.c.l.b16 %v810
    %v889 = vunpack.c.l.b16 %v811
    %v890 = vunpack.c.l.b16 %v812
    %v891 = vunpack.c.l.b16 %v813
    %v892 = vunpack.c.l.b16 %v814
    %v893 = vunpack.c.l.b16 %v815
    %v894 = vunpack.c.l.b16 %v816
    %v895 = vunpack.c.l.b16 %v817
    %v896 = vunpack.c.l.b16 %v818
    %v897 = vunpack.c.l.b16 %v819
    %v898 = vunpack.c.l.b16 %v820
    %v899 = vunpack.c.l.b16 %v821
    %v900 = vunpack.c.l.b16 %v822
    %v901 = vunpack.c.l.b16 %v823
    %v902 = vunpack.c.l.b16 %v824
    %v903 = vunpack.c.l.b16 %v825
    %v904 = vunpack.c.l.b16 %v826
    %v905 = vunpack.c.l.b16 %v827
    %v906 = vunpack.c.l.b16 %v828
    %v907 = vunpack.c.l.b16 %v829
    %v908 = vunpack.c.l.b16 %v830
    %v909 = vunpack.c.l.b16 %v831
    %v910 = vunpack.c.l.b16 %v832
    %v911 = vunpack.c.l.b16 %v833
    %v912 = vunpack.c.l.b16 %v834
    %v913 = vunpack.c.l.b16 %v835
    %v914 = vunpack.c.l.b16 %v836
    %v915 = vunpack.c.l.b16 %v837
    %v916 = vunpack.c.l.b16 %v838
    %v917 = vpack.c.b16 %v886, %v885
    %v918 = vpack.c.b16 %v888, %v887
    %v919 = vpack.c.b16 %v890, %v889
    %v920 = vpack.c.b16 %v892, %v891
    %v921 = vpack.c.b16 %v894, %v893
    %v922 = vpack.c.b16 %v896, %v895
    %v923 = vpack.c.b16 %v898, %v897
    %v924 = vpack.c.b16 %v900, %v899
    %v925 = vpack.c.b16 %v902, %v901
    %v926 = vpack.c.b16 %v904, %v903
    %v927 = vpack.c.b16 %v906, %v905
    %v928 = vpack.c.b16 %v908, %v907
    %v929 = vpack.c.b16 %v910, %v909
    %v930 = vpack.c.b16 %v912, %v911
    %v931 = vpack.c.b16 %v914, %v913
    %v932 = vpack.c.b16 %v916, %v915
    %949 = vmatpush.bf16.msra.mxu0 %v924
    %950 = vmatpush.bf16.msra.mxu0 %v923
    %951 = vmatpush.bf16.msra.mxu0 %v922
    %952 = vmatpush.bf16.msra.mxu0 %v921
    %953 = vmatpush.bf16.msra.mxu0 %v920
    %954 = vmatpush.bf16.msra.mxu0 %v919
    %955 = vmatpush.bf16.msra.mxu0 %v918
    %956 = vmatpush.bf16.msra.mxu0 %v917
    %957 = vmatmul.bf16.gmra.mxu0 %v849
    %v958 = vpop.f32.mrf.mxu0
    %v959 = vadd.f32 %v841, %v958
    %v960 = vpop.f32.mrf.mxu0
    %v961 = vadd.f32 %v841, %v960
    %962 = vdwg.mxu0
    %963 = vmatpush.bf16.msra.mxu0 %v932
    %964 = vmatpush.bf16.msra.mxu0 %v931
    %965 = vmatpush.bf16.msra.mxu0 %v930
    %966 = vmatpush.bf16.msra.mxu0 %v929
    %967 = vmatpush.bf16.msra.mxu0 %v928
    %968 = vmatpush.bf16.msra.mxu0 %v927
    %969 = vmatpush.bf16.msra.mxu0 %v926
    %970 = vmatpush.bf16.msra.mxu0 %v925
    %971 = vmatmul.bf16.gmra.mxu0 %v850
    %v972 = vpop.f32.mrf.mxu0
    %v973 = vadd.f32 %v959, %v972
    %v974 = vpop.f32.mrf.mxu0
    %v975 = vadd.f32 %v961, %v974
    %976 = vdwg.mxu0
    %v977 = vpack.c.bf16 %v973, %v973
    %v978 = vpack.c.bf16 %v975, %v975
    %v979 = vunpack.c.l.bf16 %v977
    %v980 = vunpack.c.l.bf16 %v978
    %vm981 = vcmp.gt.f32.partialorder %v979, 0.0
    %vm982 = vcmp.gt.f32.partialorder %v980, 0.0
    %v983 = vmul.f32 %v979, 0.20019531
    %v984 = vmul.f32 %v980, 0.20019531
    %v985 = vpack.c.bf16 %v983, %v983
    %v986 = vpack.c.bf16 %v984, %v984
    %vm987 = vmpackc.low %vm981, %vm981
    %vm988 = vmpackc.low %vm982, %vm982
    %v989 = vsel %vm987, %v977, %v985
    %v990 = vsel %vm988, %v978, %v986
    %v991 = vunpack.c.l.bf16 %v989
    %v992 = vunpack.c.l.bf16 %v990
    %993 = vst [vmem:[#allocation9] sm:$0xff] %v991
    %994 = vst [vmem:[#allocation9 + $0x8] sm:$0xff] %v992
    %v995 = vld [vmem:[%s8] sm:$0x1]
    %v997 = vperm.slane %v995, 0
    %v999 = vmul.f32 %v991, %v997
    %v1000 = vmul.f32 %v992, %v997
    %1001 = vadd.xlane.f32.xlu0 %v999
    %v1002 = vpop.xlane.xlu0 %1001
    %1003 = vadd.xlane.f32.xlu0 %v1000
    %v1004 = vpop.xlane.xlu0 %1003
    %s1005 = sld [smem:[#allocation2]]
    %v1006 = vstv %s1005
    %v1007 = vadd.f32 %v1002, %v1006
    %v1008 = vadd.f32 %v1004, %v1006
    %v1009 = vand.u32 2147483647, %v1007
    %v1010 = vand.u32 2147483647, %v1008
    %v1011 = vsub.f32 0.0, %v1009
    %v1012 = vsub.f32 0.0, %v1010
    %v1013 = vmul.f32 %v1011, 1.442695
    %v1014 = vpow.pop %v1013
    %v1015 = vmul.f32 %v1012, 1.442695
    %v1016 = vpow.pop %v1015
    %vm1017 = vcmp.ge.f32.partialorder %v1007, 0.0
    %vm1018 = vcmp.ge.f32.partialorder %v1008, 0.0
    %v1019 = vsel %vm1017, 1.0, %v1014
    %v1020 = vsel %vm1018, 1.0, %v1016
    %v1021 = vadd.f32 %v1014, 1.0
    %v1022 = vadd.f32 %v1016, 1.0
    %v1023 = vrcp.pop %v1021
    %v1024 = vrcp.pop %v1022
    %v1025 = vmul.f32 %v1019, %v1023
    %v1026 = vmul.f32 %v1020, %v1024
    %v1027 = vmax.f32 %v1025, 0.0
    %v1028 = vmax.f32 %v1026, 0.0
    %v1029 = vmin.f32 %v1027, 1.0
    %v1030 = vmin.f32 %v1028, 1.0
    %vm1031 = vcmask 7168
    %1032 = vst.msk [vmem:[%s10] sm:$0xff] %vm1031, %v1029
    %1033 = vst.msk [vmem:[%s10 + $0x8] sm:$0xff] %vm1031, %v1030
    // Predicated region
    $region54: #{tpu_custom_call.1} parent=1 // pred_check
      _
    $region55: #{tpu_custom_call.1} parent=1 // pred_check_branch
      %1035 = sbr.rel (0) target = $region57
    $region56: #{tpu_custom_call.1} parent=1 // pred_region
      _
    $region57: #{tpu_custom_call.1} parent=1 // pred_fallthru
      _
    // Predicated region
    $region58: #{tpu_custom_call.1} parent=1 // pred_check
      _
    $region59: #{tpu_custom_call.1} parent=1 // pred_check_branch
      %1037 = sbr.rel (0) target = $region61
    $region60: #{tpu_custom_call.1} parent=1 // pred_region
      %1039 = vsyncadd [#allocation5], 0
      %s1040 = sshll.u32 [#allocation9], 4
      %s1041 = int_to_ptr.vmem [resolvable:$true] %s1040
      %s1042 = sshll.u32 %s11, 4
      %s1043 = int_to_ptr.hbm [resolvable:$true] %s1042
      %1048 = dma.vmem_to_hbm [thread:$0]  %s1041, 256, %s1043, [#allocation5], 128, 128, 8
    $region61: #{tpu_custom_call.1} parent=1 // pred_fallthru
      _
    // Predicated region
    $region62: #{tpu_custom_call.1} parent=1 // pred_check
      _
    $region63: #{tpu_custom_call.1} parent=1 // pred_check_branch
      %1050 = sbr.rel (0) target = $region65
    $region64: #{tpu_custom_call.1} parent=1 // pred_region
      _
    $region65: #{tpu_custom_call.1} parent=1 // pred_fallthru
      _
    // Predicated region
    $region66: #{tpu_custom_call.1} parent=1 // pred_check
      _
    $region67: #{tpu_custom_call.1} parent=1 // pred_check_branch
      %1052 = sbr.rel (0) target = $region69
    $region68: #{tpu_custom_call.1} parent=1 // pred_region
      %1054 = dma.done [#allocation5], 256
    $region69: #{tpu_custom_call.1} parent=1 // pred_fallthru
      _
    %1055 = vsyncpa [#allocation4], 1
    %1056 = vsyncpa [#allocation7], 1
    %1057 = vsyncpa [#allocation5], 1

</llo_original>
